<compile_context>
chip_gen: v5e
topology: v5e:2x2
jax: 0.10.0
libtpu: 0.0.40
codegen_flags: <defaults>
</compile_context>

<pallas_src>
import functools

import numpy as np

import jax
import jax.numpy as jnp
from jax.experimental import pallas as pl
from jax.experimental.pallas import tpu as pltpu

_EPS = 1e-5


def _sepconv3x3_kernel(xc_ref, dw1_ref, pw1_ref, dw2_ref, pw2_ref,
                       em_ref, mcol_ref, o_ref, *, w, count):
    """sep_conv_3x3 forward on a halo-free lane-dense canvas.

    xc_ref  : (Cp, NSp) f32 VMEM  channel-major canvas, lane = n*H*W + r*W + c
    dw*_ref : (Cp, 9)   f32 VMEM  depthwise 3x3 taps, column t = kh*3 + kw
    pw*_ref : (Cp, Cp)  f32 VMEM  1x1 conv weights (row = out channel)
    em_ref  : (4, NSp)  f32 VMEM  edge masks [c>0, c<W-1, r>0, r<H-1]
    mcol_ref: (NSp, 1)  f32 VMEM  valid-lane column (p < N*H*W) for BN-on-MXU
    o_ref   : (Cp, NSp) f32 VMEM  full canvas; wrapper slices [:C, :N*H*W]
    """
    cp, nsp = xc_ref.shape
    inv_count = 1.0 / count

    # ---- masks: loaded + broadcast once (hoisted; JAX does not CSE these).
    em = em_ref[...]
    m_l = jnp.broadcast_to(em[0:1, :], (cp, nsp))   # col > 0
    m_r = jnp.broadcast_to(em[1:2, :], (cp, nsp))   # col < W-1
    m_u = jnp.broadcast_to(em[2:3, :], (cp, nsp))   # row > 0
    m_d = jnp.broadcast_to(em[3:4, :], (cp, nsp))   # row < H-1
    m_col = mcol_ref[...]                           # (NSp, 1) valid lanes

    def depthwise3x3(a, dw_ref):
        # Row/column-factored 3x3: 4 XLU lane rolls total (was 8).
        dw = dw_ref[...]                                       # (cp, 9)
        a_m1 = pltpu.roll(a, 1, axis=1) * m_l                  # x[r, c-1]
        a_p1 = pltpu.roll(a, nsp - 1, axis=1) * m_r            # x[r, c+1]

        def row_sum(kh):
            return (a_m1 * dw[:, 3 * kh + 0:3 * kh + 1]
                    + a   * dw[:, 3 * kh + 1:3 * kh + 2]
                    + a_p1 * dw[:, 3 * kh + 2:3 * kh + 3])

        s0, s1, s2 = row_sum(0), row_sum(1), row_sum(2)
        return (s1
                + pltpu.roll(s0, w, axis=1) * m_u              # row r-1
                + pltpu.roll(s2, nsp - w, axis=1) * m_d)       # row r+1

    def pointwise1x1(a, pw_ref):
        # (cp, cp) @ (cp, nsp) on the MXU, f32 accumulation.
        return jnp.dot(pw_ref[...], a, preferred_element_type=jnp.float32)

    def batchnorm(a):
        # train-mode BatchNorm2d(affine=False): biased per-channel stats over
        # valid lanes, both reductions done as matmuls on the (idle) MXU.
        mean = jnp.dot(a, m_col, preferred_element_type=jnp.float32) * inv_count
        d = a - mean
        var = jnp.dot(d * d, m_col, preferred_element_type=jnp.float32) * inv_count
        return d * jax.lax.rsqrt(var + _EPS)

    a = jnp.maximum(xc_ref[...], 0.0)                          # ReLU
    a = batchnorm(pointwise1x1(depthwise3x3(a, dw1_ref), pw1_ref))
    a = jnp.maximum(a, 0.0)
    a = batchnorm(pointwise1x1(depthwise3x3(a, dw2_ref), pw2_ref))
    o_ref[...] = a


@jax.jit
def train_cell_sep_conv_3x3(x, dw1, pw1, dw2, pw2):
    """TrainCell(dim, 'sep_conv_3x3', stride=1, affine=False).forward(x)."""
    N, C, H, W = x.shape
    ns = N * H * W
    Cp = -(-C // 8) * 8                      # channels -> sublane multiple
    NSp = -(-ns // 128) * 128                # flattened (N,H,W) -> lane multiple

    # Minimal layout plumbing (fused under jit): NCHW -> channel-major flat.
    xc = jnp.transpose(x.astype(jnp.float32), (1, 0, 2, 3)).reshape(C, ns)
    xc = jnp.pad(xc, ((0, Cp - C), (0, NSp - ns)))

    def prep_dw(wt):      # (C, 3, 3) -> (Cp, 9) per-channel tap columns
        return jnp.pad(wt.reshape(C, 9).astype(jnp.float32), ((0, Cp - C), (0, 0)))

    def prep_pw(wt):      # (C_out, C_in) -> (Cp, Cp)
        return jnp.pad(wt.astype(jnp.float32), ((0, Cp - C), (0, Cp - C)))

    # Compile-time boundary / validity masks (numpy -> folded constants).
    p = np.arange(NSp)
    col = p % W
    row = (p // W) % H
    em = np.stack([col > 0, col < W - 1, row > 0, row < H - 1]).astype(np.float32)
    mcol = (p < ns).astype(np.float32)[:, None]

    vmem = pl.BlockSpec(memory_space=pltpu.MemorySpace.VMEM)
    out = pl.pallas_call(
        functools.partial(_sepconv3x3_kernel, w=W, count=float(ns)),
        out_shape=jax.ShapeDtypeStruct((Cp, NSp), jnp.float32),
        in_specs=[vmem] * 7,
        out_specs=vmem,
    )(xc, prep_dw(dw1), prep_pw(pw1), prep_dw(dw2), prep_pw(pw2),
      jnp.asarray(em), jnp.asarray(mcol))

    out = out[:C, :ns].reshape(C, N, H, W)
    return jnp.transpose(out, (1, 0, 2, 3))


def _reference(x, dw1, pw1, dw2, pw2):
    """Pure-JAX reference (lax convs) for the same op."""
    N, C, H, W = x.shape

    def dwconv(a, w):
        return jax.lax.conv_general_dilated(
            a, w.reshape(C, 1, 3, 3), window_strides=(1, 1),
            padding=((1, 1), (1, 1)),
            dimension_numbers=("NCHW", "OIHW", "NCHW"),
            feature_group_count=C, precision=jax.lax.Precision.HIGHEST)

    def pwconv(a, w):
        return jax.lax.conv_general_dilated(
            a, w.reshape(C, C, 1, 1), window_strides=(1, 1), padding="VALID",
            dimension_numbers=("NCHW", "OIHW", "NCHW"),
            precision=jax.lax.Precision.HIGHEST)

    def bn(a):
        mean = jnp.mean(a, axis=(0, 2, 3), keepdims=True)
        var = jnp.mean((a - mean) ** 2, axis=(0, 2, 3), keepdims=True)
        return (a - mean) * jax.lax.rsqrt(var + _EPS)

    h = jax.nn.relu(x)
    h = bn(pwconv(dwconv(h, dw1), pw1))
    h = jax.nn.relu(h)
    h = bn(pwconv(dwconv(h, dw2), pw2))
    return h


if __name__ == "__main__":
    N, C, H, W = 2, 4, 16, 16
    key = jax.random.PRNGKey(0)
    kx, k1, k2, k3, k4 = jax.random.split(key, 5)

    x = jax.random.normal(kx, (N, C, H, W), jnp.float32)
    # Deterministic synthetic parameters (shapes follow nn.Conv2d in SepConv).
    dw1 = 0.2 * jax.random.normal(k1, (C, 3, 3), jnp.float32)   # depthwise #1
    pw1 = 0.2 * jax.random.normal(k2, (C, C), jnp.float32)      # 1x1 conv #1
    dw2 = 0.2 * jax.random.normal(k3, (C, 3, 3), jnp.float32)   # depthwise #2
    pw2 = 0.2 * jax.random.normal(k4, (C, C), jnp.float32)      # 1x1 conv #2

    out = jax.block_until_ready(train_cell_sep_conv_3x3(x, dw1, pw1, dw2, pw2))
    ref = _reference(x, dw1, pw1, dw2, pw2)

    assert out.shape == (N, C, H, W)
    err = jnp.max(jnp.abs(out - ref))
    assert jnp.allclose(out, ref, atol=1e-3, rtol=1e-3), f"max abs err {err}"
    print("KERNEL_OK")
</pallas_src>

<mosaic_0001>
module attributes {stable_mosaic.version = 11 : i64} {
  func.func @_sepconv3x3_kernel(%arg0: memref<8x512xf32, #tpu.memory_space<vmem>>, %arg1: memref<8x9xf32, #tpu.memory_space<vmem>>, %arg2: memref<8x8xf32, #tpu.memory_space<vmem>>, %arg3: memref<8x9xf32, #tpu.memory_space<vmem>>, %arg4: memref<8x8xf32, #tpu.memory_space<vmem>>, %arg5: memref<4x512xf32, #tpu.memory_space<vmem>>, %arg6: memref<512x1xf32, #tpu.memory_space<vmem>>, %arg7: memref<8x512xf32, #tpu.memory_space<vmem>>) attributes {dimension_semantics = [], scalar_prefetch = 0 : i64, scratch_operands = 0 : i64, tpu.core_type = #tpu.core_type<tc>} {
    %c0 = arith.constant 0 : index
    %c0_0 = arith.constant 0 : index
    %0 = vector.load %arg5[%c0, %c0_0] : memref<4x512xf32, #tpu.memory_space<vmem>>, vector<4x512xf32>
    %1 = vector.extract_strided_slice %0 {offsets = [0, 0], sizes = [1, 512], strides = [1, 1]} : vector<4x512xf32> to vector<1x512xf32>
    %2 = vector.shape_cast %1 : vector<1x512xf32> to vector<1x512xf32>
    %3 = vector.broadcast %2 : vector<1x512xf32> to vector<8x512xf32>
    %4 = vector.extract_strided_slice %0 {offsets = [1, 0], sizes = [1, 512], strides = [1, 1]} : vector<4x512xf32> to vector<1x512xf32>
    %5 = vector.shape_cast %4 : vector<1x512xf32> to vector<1x512xf32>
    %6 = vector.broadcast %5 : vector<1x512xf32> to vector<8x512xf32>
    %7 = vector.extract_strided_slice %0 {offsets = [2, 0], sizes = [1, 512], strides = [1, 1]} : vector<4x512xf32> to vector<1x512xf32>
    %8 = vector.shape_cast %7 : vector<1x512xf32> to vector<1x512xf32>
    %9 = vector.broadcast %8 : vector<1x512xf32> to vector<8x512xf32>
    %10 = vector.extract_strided_slice %0 {offsets = [3, 0], sizes = [1, 512], strides = [1, 1]} : vector<4x512xf32> to vector<1x512xf32>
    %11 = vector.shape_cast %10 : vector<1x512xf32> to vector<1x512xf32>
    %12 = vector.broadcast %11 : vector<1x512xf32> to vector<8x512xf32>
    %c0_1 = arith.constant 0 : index
    %c0_2 = arith.constant 0 : index
    %13 = vector.load %arg6[%c0_1, %c0_2] : memref<512x1xf32, #tpu.memory_space<vmem>>, vector<512x1xf32>
    %c0_3 = arith.constant 0 : index
    %c0_4 = arith.constant 0 : index
    %14 = vector.load %arg0[%c0_3, %c0_4] : memref<8x512xf32, #tpu.memory_space<vmem>>, vector<8x512xf32>
    %cst = arith.constant 0.000000e+00 : f32
    %15 = vector.broadcast %cst : f32 to vector<8x512xf32>
    %16 = arith.maximumf %14, %15 : vector<8x512xf32>
    %c0_5 = arith.constant 0 : index
    %c0_6 = arith.constant 0 : index
    %17 = vector.load %arg1[%c0_5, %c0_6] : memref<8x9xf32, #tpu.memory_space<vmem>>, vector<8x9xf32>
    %c1_i32 = arith.constant 1 : i32
    %18 = tpu.dynamic_rotate %16 by %c1_i32 dim 1 : vector<8x512xf32>, i32 -> vector<8x512xf32>
    %19 = arith.mulf %18, %3 : vector<8x512xf32>
    %c511_i32 = arith.constant 511 : i32
    %20 = tpu.dynamic_rotate %16 by %c511_i32 dim 1 : vector<8x512xf32>, i32 -> vector<8x512xf32>
    %21 = arith.mulf %20, %6 : vector<8x512xf32>
    %22 = vector.extract_strided_slice %17 {offsets = [0, 0], sizes = [8, 1], strides = [1, 1]} : vector<8x9xf32> to vector<8x1xf32>
    %23 = vector.broadcast %22 : vector<8x1xf32> to vector<8x512xf32>
    %24 = arith.mulf %19, %23 : vector<8x512xf32>
    %25 = vector.extract_strided_slice %17 {offsets = [0, 1], sizes = [8, 1], strides = [1, 1]} : vector<8x9xf32> to vector<8x1xf32>
    %26 = vector.broadcast %25 : vector<8x1xf32> to vector<8x512xf32>
    %27 = arith.mulf %16, %26 : vector<8x512xf32>
    %28 = arith.addf %24, %27 : vector<8x512xf32>
    %29 = vector.extract_strided_slice %17 {offsets = [0, 2], sizes = [8, 1], strides = [1, 1]} : vector<8x9xf32> to vector<8x1xf32>
    %30 = vector.broadcast %29 : vector<8x1xf32> to vector<8x512xf32>
    %31 = arith.mulf %21, %30 : vector<8x512xf32>
    %32 = arith.addf %28, %31 : vector<8x512xf32>
    %33 = vector.extract_strided_slice %17 {offsets = [0, 3], sizes = [8, 1], strides = [1, 1]} : vector<8x9xf32> to vector<8x1xf32>
    %34 = vector.broadcast %33 : vector<8x1xf32> to vector<8x512xf32>
    %35 = arith.mulf %19, %34 : vector<8x512xf32>
    %36 = vector.extract_strided_slice %17 {offsets = [0, 4], sizes = [8, 1], strides = [1, 1]} : vector<8x9xf32> to vector<8x1xf32>
    %37 = vector.broadcast %36 : vector<8x1xf32> to vector<8x512xf32>
    %38 = arith.mulf %16, %37 : vector<8x512xf32>
    %39 = arith.addf %35, %38 : vector<8x512xf32>
    %40 = vector.extract_strided_slice %17 {offsets = [0, 5], sizes = [8, 1], strides = [1, 1]} : vector<8x9xf32> to vector<8x1xf32>
    %41 = vector.broadcast %40 : vector<8x1xf32> to vector<8x512xf32>
    %42 = arith.mulf %21, %41 : vector<8x512xf32>
    %43 = arith.addf %39, %42 : vector<8x512xf32>
    %44 = vector.extract_strided_slice %17 {offsets = [0, 6], sizes = [8, 1], strides = [1, 1]} : vector<8x9xf32> to vector<8x1xf32>
    %45 = vector.broadcast %44 : vector<8x1xf32> to vector<8x512xf32>
    %46 = arith.mulf %19, %45 : vector<8x512xf32>
    %47 = vector.extract_strided_slice %17 {offsets = [0, 7], sizes = [8, 1], strides = [1, 1]} : vector<8x9xf32> to vector<8x1xf32>
    %48 = vector.broadcast %47 : vector<8x1xf32> to vector<8x512xf32>
    %49 = arith.mulf %16, %48 : vector<8x512xf32>
    %50 = arith.addf %46, %49 : vector<8x512xf32>
    %51 = vector.extract_strided_slice %17 {offsets = [0, 8], sizes = [8, 1], strides = [1, 1]} : vector<8x9xf32> to vector<8x1xf32>
    %52 = vector.broadcast %51 : vector<8x1xf32> to vector<8x512xf32>
    %53 = arith.mulf %21, %52 : vector<8x512xf32>
    %54 = arith.addf %50, %53 : vector<8x512xf32>
    %c16_i32 = arith.constant 16 : i32
    %55 = tpu.dynamic_rotate %32 by %c16_i32 dim 1 : vector<8x512xf32>, i32 -> vector<8x512xf32>
    %56 = arith.mulf %55, %9 : vector<8x512xf32>
    %57 = arith.addf %43, %56 : vector<8x512xf32>
    %c496_i32 = arith.constant 496 : i32
    %58 = tpu.dynamic_rotate %54 by %c496_i32 dim 1 : vector<8x512xf32>, i32 -> vector<8x512xf32>
    %59 = arith.mulf %58, %12 : vector<8x512xf32>
    %60 = arith.addf %57, %59 : vector<8x512xf32>
    %c0_7 = arith.constant 0 : index
    %c0_8 = arith.constant 0 : index
    %61 = vector.load %arg2[%c0_7, %c0_8] : memref<8x8xf32, #tpu.memory_space<vmem>>, vector<8x8xf32>
    %cst_9 = arith.constant dense<0.000000e+00> : vector<8x512xf32>
    %62 = tpu.matmul %61, %60, %cst_9 {dimension_numbers = #tpu.dot_dimension_numbers<[1], [0], [0], [1], [0, 0, 1, 1], [], []>} : vector<8x8xf32>, vector<8x512xf32>, vector<8x512xf32> -> vector<8x512xf32>
    %cst_10 = arith.constant dense<0.000000e+00> : vector<8x1xf32>
    %63 = tpu.matmul %62, %13, %cst_10 {dimension_numbers = #tpu.dot_dimension_numbers<[1], [0], [0], [1], [0, 0, 1, 1], [], []>} : vector<8x512xf32>, vector<512x1xf32>, vector<8x1xf32> -> vector<8x1xf32>
    %cst_11 = arith.constant 0.001953125 : f32
    %64 = vector.broadcast %cst_11 : f32 to vector<8x1xf32>
    %65 = arith.mulf %63, %64 : vector<8x1xf32>
    %66 = vector.broadcast %65 : vector<8x1xf32> to vector<8x512xf32>
    %67 = arith.subf %62, %66 : vector<8x512xf32>
    %68 = arith.mulf %67, %67 : vector<8x512xf32>
    %cst_12 = arith.constant dense<0.000000e+00> : vector<8x1xf32>
    %69 = tpu.matmul %68, %13, %cst_12 {dimension_numbers = #tpu.dot_dimension_numbers<[1], [0], [0], [1], [0, 0, 1, 1], [], []>} : vector<8x512xf32>, vector<512x1xf32>, vector<8x1xf32> -> vector<8x1xf32>
    %cst_13 = arith.constant 0.001953125 : f32
    %70 = vector.broadcast %cst_13 : f32 to vector<8x1xf32>
    %71 = arith.mulf %69, %70 : vector<8x1xf32>
    %cst_14 = arith.constant 9.99999974E-6 : f32
    %72 = vector.broadcast %cst_14 : f32 to vector<8x1xf32>
    %73 = arith.addf %71, %72 : vector<8x1xf32>
    %74 = math.rsqrt %73 : vector<8x1xf32>
    %75 = vector.broadcast %74 : vector<8x1xf32> to vector<8x512xf32>
    %76 = arith.mulf %67, %75 : vector<8x512xf32>
    %cst_15 = arith.constant 0.000000e+00 : f32
    %77 = vector.broadcast %cst_15 : f32 to vector<8x512xf32>
    %78 = arith.maximumf %76, %77 : vector<8x512xf32>
    %c0_16 = arith.constant 0 : index
    %c0_17 = arith.constant 0 : index
    %79 = vector.load %arg3[%c0_16, %c0_17] : memref<8x9xf32, #tpu.memory_space<vmem>>, vector<8x9xf32>
    %c1_i32_18 = arith.constant 1 : i32
    %80 = tpu.dynamic_rotate %78 by %c1_i32_18 dim 1 : vector<8x512xf32>, i32 -> vector<8x512xf32>
    %81 = arith.mulf %80, %3 : vector<8x512xf32>
    %c511_i32_19 = arith.constant 511 : i32
    %82 = tpu.dynamic_rotate %78 by %c511_i32_19 dim 1 : vector<8x512xf32>, i32 -> vector<8x512xf32>
    %83 = arith.mulf %82, %6 : vector<8x512xf32>
    %84 = vector.extract_strided_slice %79 {offsets = [0, 0], sizes = [8, 1], strides = [1, 1]} : vector<8x9xf32> to vector<8x1xf32>
    %85 = vector.broadcast %84 : vector<8x1xf32> to vector<8x512xf32>
    %86 = arith.mulf %81, %85 : vector<8x512xf32>
    %87 = vector.extract_strided_slice %79 {offsets = [0, 1], sizes = [8, 1], strides = [1, 1]} : vector<8x9xf32> to vector<8x1xf32>
    %88 = vector.broadcast %87 : vector<8x1xf32> to vector<8x512xf32>
    %89 = arith.mulf %78, %88 : vector<8x512xf32>
    %90 = arith.addf %86, %89 : vector<8x512xf32>
    %91 = vector.extract_strided_slice %79 {offsets = [0, 2], sizes = [8, 1], strides = [1, 1]} : vector<8x9xf32> to vector<8x1xf32>
    %92 = vector.broadcast %91 : vector<8x1xf32> to vector<8x512xf32>
    %93 = arith.mulf %83, %92 : vector<8x512xf32>
    %94 = arith.addf %90, %93 : vector<8x512xf32>
    %95 = vector.extract_strided_slice %79 {offsets = [0, 3], sizes = [8, 1], strides = [1, 1]} : vector<8x9xf32> to vector<8x1xf32>
    %96 = vector.broadcast %95 : vector<8x1xf32> to vector<8x512xf32>
    %97 = arith.mulf %81, %96 : vector<8x512xf32>
    %98 = vector.extract_strided_slice %79 {offsets = [0, 4], sizes = [8, 1], strides = [1, 1]} : vector<8x9xf32> to vector<8x1xf32>
    %99 = vector.broadcast %98 : vector<8x1xf32> to vector<8x512xf32>
    %100 = arith.mulf %78, %99 : vector<8x512xf32>
    %101 = arith.addf %97, %100 : vector<8x512xf32>
    %102 = vector.extract_strided_slice %79 {offsets = [0, 5], sizes = [8, 1], strides = [1, 1]} : vector<8x9xf32> to vector<8x1xf32>
    %103 = vector.broadcast %102 : vector<8x1xf32> to vector<8x512xf32>
    %104 = arith.mulf %83, %103 : vector<8x512xf32>
    %105 = arith.addf %101, %104 : vector<8x512xf32>
    %106 = vector.extract_strided_slice %79 {offsets = [0, 6], sizes = [8, 1], strides = [1, 1]} : vector<8x9xf32> to vector<8x1xf32>
    %107 = vector.broadcast %106 : vector<8x1xf32> to vector<8x512xf32>
    %108 = arith.mulf %81, %107 : vector<8x512xf32>
    %109 = vector.extract_strided_slice %79 {offsets = [0, 7], sizes = [8, 1], strides = [1, 1]} : vector<8x9xf32> to vector<8x1xf32>
    %110 = vector.broadcast %109 : vector<8x1xf32> to vector<8x512xf32>
    %111 = arith.mulf %78, %110 : vector<8x512xf32>
    %112 = arith.addf %108, %111 : vector<8x512xf32>
    %113 = vector.extract_strided_slice %79 {offsets = [0, 8], sizes = [8, 1], strides = [1, 1]} : vector<8x9xf32> to vector<8x1xf32>
    %114 = vector.broadcast %113 : vector<8x1xf32> to vector<8x512xf32>
    %115 = arith.mulf %83, %114 : vector<8x512xf32>
    %116 = arith.addf %112, %115 : vector<8x512xf32>
    %c16_i32_20 = arith.constant 16 : i32
    %117 = tpu.dynamic_rotate %94 by %c16_i32_20 dim 1 : vector<8x512xf32>, i32 -> vector<8x512xf32>
    %118 = arith.mulf %117, %9 : vector<8x512xf32>
    %119 = arith.addf %105, %118 : vector<8x512xf32>
    %c496_i32_21 = arith.constant 496 : i32
    %120 = tpu.dynamic_rotate %116 by %c496_i32_21 dim 1 : vector<8x512xf32>, i32 -> vector<8x512xf32>
    %121 = arith.mulf %120, %12 : vector<8x512xf32>
    %122 = arith.addf %119, %121 : vector<8x512xf32>
    %c0_22 = arith.constant 0 : index
    %c0_23 = arith.constant 0 : index
    %123 = vector.load %arg4[%c0_22, %c0_23] : memref<8x8xf32, #tpu.memory_space<vmem>>, vector<8x8xf32>
    %cst_24 = arith.constant dense<0.000000e+00> : vector<8x512xf32>
    %124 = tpu.matmul %123, %122, %cst_24 {dimension_numbers = #tpu.dot_dimension_numbers<[1], [0], [0], [1], [0, 0, 1, 1], [], []>} : vector<8x8xf32>, vector<8x512xf32>, vector<8x512xf32> -> vector<8x512xf32>
    %cst_25 = arith.constant dense<0.000000e+00> : vector<8x1xf32>
    %125 = tpu.matmul %124, %13, %cst_25 {dimension_numbers = #tpu.dot_dimension_numbers<[1], [0], [0], [1], [0, 0, 1, 1], [], []>} : vector<8x512xf32>, vector<512x1xf32>, vector<8x1xf32> -> vector<8x1xf32>
    %cst_26 = arith.constant 0.001953125 : f32
    %126 = vector.broadcast %cst_26 : f32 to vector<8x1xf32>
    %127 = arith.mulf %125, %126 : vector<8x1xf32>
    %128 = vector.broadcast %127 : vector<8x1xf32> to vector<8x512xf32>
    %129 = arith.subf %124, %128 : vector<8x512xf32>
    %130 = arith.mulf %129, %129 : vector<8x512xf32>
    %cst_27 = arith.constant dense<0.000000e+00> : vector<8x1xf32>
    %131 = tpu.matmul %130, %13, %cst_27 {dimension_numbers = #tpu.dot_dimension_numbers<[1], [0], [0], [1], [0, 0, 1, 1], [], []>} : vector<8x512xf32>, vector<512x1xf32>, vector<8x1xf32> -> vector<8x1xf32>
    %cst_28 = arith.constant 0.001953125 : f32
    %132 = vector.broadcast %cst_28 : f32 to vector<8x1xf32>
    %133 = arith.mulf %131, %132 : vector<8x1xf32>
    %cst_29 = arith.constant 9.99999974E-6 : f32
    %134 = vector.broadcast %cst_29 : f32 to vector<8x1xf32>
    %135 = arith.addf %133, %134 : vector<8x1xf32>
    %136 = math.rsqrt %135 : vector<8x1xf32>
    %137 = vector.broadcast %136 : vector<8x1xf32> to vector<8x512xf32>
    %138 = arith.mulf %129, %137 : vector<8x512xf32>
    %c0_30 = arith.constant 0 : index
    %c0_31 = arith.constant 0 : index
    %139 = vector.load %arg7[%c0_30, %c0_31] : memref<8x512xf32, #tpu.memory_space<vmem>>, vector<8x512xf32>
    tpu.vector_store %arg7[%c0_30, %c0_31], %138 {strides = array<i32>} : memref<8x512xf32, #tpu.memory_space<vmem>>, vector<8x512xf32>,
    return
  }
}

</mosaic_0001>

<llo_original>
// kernel: train_cell_sep_conv_3x3.1
$region0: #{train_cell_sep_conv_3x3.1}
  #allocation0 [shape = 'u32[]', space=smem, size = 0x4, offset = 0x4, fixed_abs, tag = 'smem constant byte address 0x4 - core index']
  #allocation1 [shape = 'u32[72,128]{1,0:T(1,128)}', space=vmem, size = 0x9000, scoped, tag = 'internal scratch']
  %s0 = inlined_call_operand.vmem [shape: f32[8,512], index: 0, kind: input, shape index: {}]
  %s1 = inlined_call_operand.vmem [shape: f32[8,9], index: 1, kind: input, shape index: {}]
  %s2 = inlined_call_operand.vmem [shape: f32[8,8], index: 2, kind: input, shape index: {}]
  %s3 = inlined_call_operand.vmem [shape: f32[8,9], index: 3, kind: input, shape index: {}]
  %s4 = inlined_call_operand.vmem [shape: f32[8,8], index: 4, kind: input, shape index: {}]
  %s5 = inlined_call_operand.vmem [shape: f32[4,512], index: 5, kind: input, shape index: {}]
  %s6 = inlined_call_operand.vmem [shape: f32[512,1], index: 6, kind: input, shape index: {}]
  %s7 = inlined_call_operand.vmem [shape: f32[8,512], index: 7, kind: output, shape index: {}]
  %s8 = sld [smem:[#allocation0]]
  $region38: #{train_cell_sep_conv_3x3.1} parent=0
    _
  %s10 = ssub.s32 1, %s8
  %s11 = scalar_select 0, %s10, %s8
  // Predicated region
  $region2: #{train_cell_sep_conv_3x3.1} parent=0 // pred_check
    _
  $region3: #{train_cell_sep_conv_3x3.1} parent=0 // pred_check_branch
    %13 = sbr.rel (0) target = $region5
  $region4: #{train_cell_sep_conv_3x3.1} parent=0 // pred_region
    _
  $region5: #{train_cell_sep_conv_3x3.1} parent=0 // pred_fallthru
    _
  // Predicated region
  $region6: #{train_cell_sep_conv_3x3.1} parent=0 // pred_check
    _
  $region7: #{train_cell_sep_conv_3x3.1} parent=0 // pred_check_branch
    %15 = sbr.rel (0) target = $region9
  $region8: #{train_cell_sep_conv_3x3.1} parent=0 // pred_region
    _
  $region9: #{train_cell_sep_conv_3x3.1} parent=0 // pred_fallthru
    _
  // Predicated region
  $region10: #{train_cell_sep_conv_3x3.1} parent=0 // pred_check
    _
  $region11: #{train_cell_sep_conv_3x3.1} parent=0 // pred_check_branch
    %17 = sbr.rel (0) target = $region13
  $region12: #{train_cell_sep_conv_3x3.1} parent=0 // pred_region
    _
  $region13: #{train_cell_sep_conv_3x3.1} parent=0 // pred_fallthru
    _
  // Predicated region
  $region14: #{train_cell_sep_conv_3x3.1} parent=0 // pred_check
    _
  $region15: #{train_cell_sep_conv_3x3.1} parent=0 // pred_check_branch
    %19 = sbr.rel (0) target = $region17
  $region16: #{train_cell_sep_conv_3x3.1} parent=0 // pred_region
    _
  $region17: #{train_cell_sep_conv_3x3.1} parent=0 // pred_fallthru
    _
  // Predicated region
  $region18: #{train_cell_sep_conv_3x3.1} parent=0 // pred_check
    _
  $region19: #{train_cell_sep_conv_3x3.1} parent=0 // pred_check_branch
    %21 = sbr.rel (0) target = $region21
  $region20: #{train_cell_sep_conv_3x3.1} parent=0 // pred_region
    _
  $region21: #{train_cell_sep_conv_3x3.1} parent=0 // pred_fallthru
    _
  // Predicated region
  $region22: #{train_cell_sep_conv_3x3.1} parent=0 // pred_check
    _
  $region23: #{train_cell_sep_conv_3x3.1} parent=0 // pred_check_branch
    %23 = sbr.rel (0) target = $region25
  $region24: #{train_cell_sep_conv_3x3.1} parent=0 // pred_region
    _
  $region25: #{train_cell_sep_conv_3x3.1} parent=0 // pred_fallthru
    _
  // Predicated region
  $region26: #{train_cell_sep_conv_3x3.1} parent=0 // pred_check
    _
  $region27: #{train_cell_sep_conv_3x3.1} parent=0 // pred_check_branch
    %25 = sbr.rel (0) target = $region29
  $region28: #{train_cell_sep_conv_3x3.1} parent=0 // pred_region
    _
  $region29: #{train_cell_sep_conv_3x3.1} parent=0 // pred_fallthru
    _
  %v26 = vld [vmem:[%s5] sm:$0xff]
  %v27 = vld [vmem:[%s5 + $0x8] sm:$0xff]
  %v30 = vperm.slane %v26, 0
  %v31 = vperm.slane %v26, 4
  %v32 = vperm.slane %v27, 0
  %v33 = vperm.slane %v27, 4
  %v38 = vperm.slane %v30, 0
  %v39 = vperm.slane %v31, 0
  %v40 = vperm.slane %v32, 0
  %v41 = vperm.slane %v33, 0
  %v42 = vperm.slane %v26, 1
  %v43 = vperm.slane %v26, 5
  %v44 = vperm.slane %v27, 1
  %v45 = vperm.slane %v27, 5
  %v50 = vperm.slane %v42, 1
  %v51 = vperm.slane %v43, 1
  %v52 = vperm.slane %v44, 1
  %v53 = vperm.slane %v45, 1
  %v54 = vperm.slane %v26, 2
  %v55 = vperm.slane %v26, 6
  %v56 = vperm.slane %v27, 2
  %v57 = vperm.slane %v27, 6
  %v62 = vperm.slane %v54, 2
  %v63 = vperm.slane %v55, 2
  %v64 = vperm.slane %v56, 2
  %v65 = vperm.slane %v57, 2
  %v66 = vperm.slane %v26, 3
  %v67 = vperm.slane %v26, 7
  %v68 = vperm.slane %v27, 3
  %v69 = vperm.slane %v27, 7
  %v74 = vperm.slane %v66, 3
  %v75 = vperm.slane %v67, 3
  %v76 = vperm.slane %v68, 3
  %v77 = vperm.slane %v69, 3
  %v78 = vld [vmem:[%s6] sm:$0xff]
  %v79 = vld [vmem:[%s6 + $0x8] sm:$0xff]
  %v80 = vld [vmem:[%s6 + $0x10] sm:$0xff]
  %v81 = vld [vmem:[%s6 + $0x18] sm:$0xff]
  %v82 = vld [vmem:[%s6 + $0x20] sm:$0xff]
  %v83 = vld [vmem:[%s6 + $0x28] sm:$0xff]
  %v84 = vld [vmem:[%s6 + $0x30] sm:$0xff]
  %v85 = vld [vmem:[%s6 + $0x38] sm:$0xff]
  %v86 = vld [vmem:[%s6 + $0x40] sm:$0xff]
  %v87 = vld [vmem:[%s6 + $0x48] sm:$0xff]
  %v88 = vld [vmem:[%s6 + $0x50] sm:$0xff]
  %v89 = vld [vmem:[%s6 + $0x58] sm:$0xff]
  %v90 = vld [vmem:[%s6 + $0x60] sm:$0xff]
  %v91 = vld [vmem:[%s6 + $0x68] sm:$0xff]
  %v92 = vld [vmem:[%s6 + $0x70] sm:$0xff]
  %v93 = vld [vmem:[%s6 + $0x78] sm:$0xff]
  %v94 = vld [vmem:[%s6 + $0x80] sm:$0xff]
  %v95 = vld [vmem:[%s6 + $0x88] sm:$0xff]
  %v96 = vld [vmem:[%s6 + $0x90] sm:$0xff]
  %v97 = vld [vmem:[%s6 + $0x98] sm:$0xff]
  %v98 = vld [vmem:[%s6 + $0xa0] sm:$0xff]
  %v99 = vld [vmem:[%s6 + $0xa8] sm:$0xff]
  %v100 = vld [vmem:[%s6 + $0xb0] sm:$0xff]
  %v101 = vld [vmem:[%s6 + $0xb8] sm:$0xff]
  %v102 = vld [vmem:[%s6 + $0xc0] sm:$0xff]
  %v103 = vld [vmem:[%s6 + $0xc8] sm:$0xff]
  %v104 = vld [vmem:[%s6 + $0xd0] sm:$0xff]
  %v105 = vld [vmem:[%s6 + $0xd8] sm:$0xff]
  %v106 = vld [vmem:[%s6 + $0xe0] sm:$0xff]
  %v107 = vld [vmem:[%s6 + $0xe8] sm:$0xff]
  %v108 = vld [vmem:[%s6 + $0xf0] sm:$0xff]
  %v109 = vld [vmem:[%s6 + $0xf8] sm:$0xff]
  %v110 = vld [vmem:[%s6 + $0x100] sm:$0xff]
  %v111 = vld [vmem:[%s6 + $0x108] sm:$0xff]
  %v112 = vld [vmem:[%s6 + $0x110] sm:$0xff]
  %v113 = vld [vmem:[%s6 + $0x118] sm:$0xff]
  %v114 = vld [vmem:[%s6 + $0x120] sm:$0xff]
  %v115 = vld [vmem:[%s6 + $0x128] sm:$0xff]
  %v116 = vld [vmem:[%s6 + $0x130] sm:$0xff]
  %v117 = vld [vmem:[%s6 + $0x138] sm:$0xff]
  %v118 = vld [vmem:[%s6 + $0x140] sm:$0xff]
  %v119 = vld [vmem:[%s6 + $0x148] sm:$0xff]
  %v120 = vld [vmem:[%s6 + $0x150] sm:$0xff]
  %v121 = vld [vmem:[%s6 + $0x158] sm:$0xff]
  %v122 = vld [vmem:[%s6 + $0x160] sm:$0xff]
  %v123 = vld [vmem:[%s6 + $0x168] sm:$0xff]
  %v124 = vld [vmem:[%s6 + $0x170] sm:$0xff]
  %v125 = vld [vmem:[%s6 + $0x178] sm:$0xff]
  %v126 = vld [vmem:[%s6 + $0x180] sm:$0xff]
  %v127 = vld [vmem:[%s6 + $0x188] sm:$0xff]
  %v128 = vld [vmem:[%s6 + $0x190] sm:$0xff]
  %v129 = vld [vmem:[%s6 + $0x198] sm:$0xff]
  %v130 = vld [vmem:[%s6 + $0x1a0] sm:$0xff]
  %v131 = vld [vmem:[%s6 + $0x1a8] sm:$0xff]
  %v132 = vld [vmem:[%s6 + $0x1b0] sm:$0xff]
  %v133 = vld [vmem:[%s6 + $0x1b8] sm:$0xff]
  %v134 = vld [vmem:[%s6 + $0x1c0] sm:$0xff]
  %v135 = vld [vmem:[%s6 + $0x1c8] sm:$0xff]
  %v136 = vld [vmem:[%s6 + $0x1d0] sm:$0xff]
  %v137 = vld [vmem:[%s6 + $0x1d8] sm:$0xff]
  %v138 = vld [vmem:[%s6 + $0x1e0] sm:$0xff]
  %v139 = vld [vmem:[%s6 + $0x1e8] sm:$0xff]
  %v140 = vld [vmem:[%s6 + $0x1f0] sm:$0xff]
  %v141 = vld [vmem:[%s6 + $0x1f8] sm:$0xff]
  %v142 = vld [vmem:[%s0] sm:$0xff]
  %v143 = vld [vmem:[%s0 + $0x8] sm:$0xff]
  %v144 = vld [vmem:[%s0 + $0x10] sm:$0xff]
  %v145 = vld [vmem:[%s0 + $0x18] sm:$0xff]
  %v146 = vmax.f32 %v142, 0.0
  %v147 = vmax.f32 %v143, 0.0
  %v148 = vmax.f32 %v144, 0.0
  %v149 = vmax.f32 %v145, 0.0
  %v150 = vld [vmem:[%s1] sm:$0xff]
  %151 = vrot.lane.b32.xlu0 %v146, 1
  %v152 = vpop.permute.xlu0 %151
  %153 = vrot.lane.b32.xlu0 %v147, 1
  %v154 = vpop.permute.xlu0 %153
  %155 = vrot.lane.b32.xlu0 %v148, 1
  %v156 = vpop.permute.xlu0 %155
  %157 = vrot.lane.b32.xlu0 %v149, 1
  %v158 = vpop.permute.xlu0 %157
  %v159 = vlaneseq
  %v160 = vand.u32 %v159, 127
  %vm161 = vcmp.lt.s32.totalorder %v160, 1
  %v162 = vsel %vm161, %v156, %v158
  %v163 = vsel %vm161, %v154, %v156
  %v164 = vsel %vm161, %v152, %v154
  %v165 = vsel %vm161, %v158, %v152
  %v166 = vmul.f32 %v165, %v38
  %v167 = vmul.f32 %v164, %v39
  %v168 = vmul.f32 %v163, %v40
  %v169 = vmul.f32 %v162, %v41
  %170 = vrot.lane.b32.xlu0 %v146, 127
  %v171 = vpop.permute.xlu0 %170
  %172 = vrot.lane.b32.xlu0 %v147, 127
  %v173 = vpop.permute.xlu0 %172
  %174 = vrot.lane.b32.xlu0 %v148, 127
  %v175 = vpop.permute.xlu0 %174
  %176 = vrot.lane.b32.xlu0 %v149, 127
  %v177 = vpop.permute.xlu0 %176
  %vm178 = vcmp.lt.s32.totalorder %v160, 127
  %v179 = vsel %vm178, %v175, %v177
  %v180 = vsel %vm178, %v173, %v175
  %v181 = vsel %vm178, %v171, %v173
  %v182 = vsel %vm178, %v177, %v171
  %v183 = vmul.f32 %v181, %v50
  %v184 = vmul.f32 %v180, %v51
  %v185 = vmul.f32 %v179, %v52
  %v186 = vmul.f32 %v182, %v53
  %188 = vset.pattern.permute.xlu0 0
  %189 = vperm.xlu0 %188, %v150
  %v190 = vpop.permute.xlu0 %189
  %v192 = vmul.f32 %v166, %v190
  %v193 = vmul.f32 %v167, %v190
  %v194 = vmul.f32 %v168, %v190
  %v195 = vmul.f32 %v169, %v190
  %196 = vset.pattern.permute.xlu0 1
  %197 = vperm.xlu0 %196, %v150
  %v198 = vpop.permute.xlu0 %197
  %v200 = vmul.f32 %v146, %v198
  %v201 = vmul.f32 %v147, %v198
  %v202 = vmul.f32 %v148, %v198
  %v203 = vmul.f32 %v149, %v198
  %v204 = vadd.f32 %v192, %v200
  %v205 = vadd.f32 %v193, %v201
  %v206 = vadd.f32 %v194, %v202
  %v207 = vadd.f32 %v195, %v203
  %208 = vset.pattern.permute.xlu0 2
  %209 = vperm.xlu0 %208, %v150
  %v210 = vpop.permute.xlu0 %209
  %v212 = vmul.f32 %v183, %v210
  %v213 = vmul.f32 %v184, %v210
  %v214 = vmul.f32 %v185, %v210
  %v215 = vmul.f32 %v186, %v210
  %v216 = vadd.f32 %v204, %v212
  %v217 = vadd.f32 %v205, %v213
  %v218 = vadd.f32 %v206, %v214
  %v219 = vadd.f32 %v207, %v215
  %220 = vset.pattern.permute.xlu0 3
  %221 = vperm.xlu0 %220, %v150
  %v222 = vpop.permute.xlu0 %221
  %v224 = vmul.f32 %v166, %v222
  %v225 = vmul.f32 %v167, %v222
  %v226 = vmul.f32 %v168, %v222
  %v227 = vmul.f32 %v169, %v222
  %228 = vset.pattern.permute.xlu0 4
  %229 = vperm.xlu0 %228, %v150
  %v230 = vpop.permute.xlu0 %229
  %v232 = vmul.f32 %v146, %v230
  %v233 = vmul.f32 %v147, %v230
  %v234 = vmul.f32 %v148, %v230
  %v235 = vmul.f32 %v149, %v230
  %v236 = vadd.f32 %v224, %v232
  %v237 = vadd.f32 %v225, %v233
  %v238 = vadd.f32 %v226, %v234
  %v239 = vadd.f32 %v227, %v235
  %240 = vset.pattern.permute.xlu0 5
  %241 = vperm.xlu0 %240, %v150
  %v242 = vpop.permute.xlu0 %241
  %v244 = vmul.f32 %v183, %v242
  %v245 = vmul.f32 %v184, %v242
  %v246 = vmul.f32 %v185, %v242
  %v247 = vmul.f32 %v186, %v242
  %v248 = vadd.f32 %v236, %v244
  %v249 = vadd.f32 %v237, %v245
  %v250 = vadd.f32 %v238, %v246
  %v251 = vadd.f32 %v239, %v247
  %252 = vset.pattern.permute.xlu0 6
  %253 = vperm.xlu0 %252, %v150
  %v254 = vpop.permute.xlu0 %253
  %v256 = vmul.f32 %v166, %v254
  %v257 = vmul.f32 %v167, %v254
  %v258 = vmul.f32 %v168, %v254
  %v259 = vmul.f32 %v169, %v254
  %260 = vset.pattern.permute.xlu0 7
  %261 = vperm.xlu0 %260, %v150
  %v262 = vpop.permute.xlu0 %261
  %v264 = vmul.f32 %v146, %v262
  %v265 = vmul.f32 %v147, %v262
  %v266 = vmul.f32 %v148, %v262
  %v267 = vmul.f32 %v149, %v262
  %v268 = vadd.f32 %v256, %v264
  %v269 = vadd.f32 %v257, %v265
  %v270 = vadd.f32 %v258, %v266
  %v271 = vadd.f32 %v259, %v267
  %272 = vset.pattern.permute.xlu0 8
  %273 = vperm.xlu0 %272, %v150
  %v274 = vpop.permute.xlu0 %273
  %v276 = vmul.f32 %v183, %v274
  %v277 = vmul.f32 %v184, %v274
  %v278 = vmul.f32 %v185, %v274
  %v279 = vmul.f32 %v186, %v274
  %v280 = vadd.f32 %v268, %v276
  %v281 = vadd.f32 %v269, %v277
  %v282 = vadd.f32 %v270, %v278
  %v283 = vadd.f32 %v271, %v279
  %284 = vrot.lane.b32.xlu0 %v216, 16
  %v285 = vpop.permute.xlu0 %284
  %286 = vrot.lane.b32.xlu0 %v217, 16
  %v287 = vpop.permute.xlu0 %286
  %288 = vrot.lane.b32.xlu0 %v218, 16
  %v289 = vpop.permute.xlu0 %288
  %290 = vrot.lane.b32.xlu0 %v219, 16
  %v291 = vpop.permute.xlu0 %290
  %vm292 = vcmp.lt.s32.totalorder %v160, 16
  %v293 = vsel %vm292, %v289, %v291
  %v294 = vsel %vm292, %v287, %v289
  %v295 = vsel %vm292, %v285, %v287
  %v296 = vsel %vm292, %v291, %v285
  %v297 = vmul.f32 %v296, %v62
  %v298 = vmul.f32 %v295, %v63
  %v299 = vmul.f32 %v294, %v64
  %v300 = vmul.f32 %v293, %v65
  %v301 = vadd.f32 %v248, %v297
  %v302 = vadd.f32 %v249, %v298
  %v303 = vadd.f32 %v250, %v299
  %v304 = vadd.f32 %v251, %v300
  %305 = vrot.lane.b32.xlu0 %v280, 112
  %v306 = vpop.permute.xlu0 %305
  %307 = vrot.lane.b32.xlu0 %v281, 112
  %v308 = vpop.permute.xlu0 %307
  %309 = vrot.lane.b32.xlu0 %v282, 112
  %v310 = vpop.permute.xlu0 %309
  %311 = vrot.lane.b32.xlu0 %v283, 112
  %v312 = vpop.permute.xlu0 %311
  %vm313 = vcmp.lt.s32.totalorder %v160, 112
  %v314 = vsel %vm313, %v310, %v312
  %v315 = vsel %vm313, %v308, %v310
  %v316 = vsel %vm313, %v306, %v308
  %v317 = vsel %vm313, %v312, %v306
  %v318 = vmul.f32 %v316, %v74
  %v319 = vmul.f32 %v315, %v75
  %v320 = vmul.f32 %v314, %v76
  %v321 = vmul.f32 %v317, %v77
  %v322 = vadd.f32 %v301, %v318
  %v323 = vadd.f32 %v302, %v319
  %v324 = vadd.f32 %v303, %v320
  %v325 = vadd.f32 %v304, %v321
  %v326 = vld [vmem:[%s2] sm:$0xff]
  %vm327 = vcmask 64512
  %v329 = vsel %vm327, %v326, 0
  %331 = vmatpush.msra.mxu0 0.0
  %332 = vmatpush.msra.mxu0 0.0
  %333 = vmatpush.msra.mxu0 0.0
  %334 = vmatpush.msra.mxu0 0.0
  %335 = vmatpush.msra.mxu0 0.0
  %336 = vmatpush.msra.mxu0 0.0
  %337 = vmatpush.msra.mxu0 0.0
  %338 = vmatpush.msra.mxu0 0.0
  %339 = vmatpush.msra.mxu0 0.0
  %340 = vmatpush.msra.mxu0 0.0
  %341 = vmatpush.msra.mxu0 0.0
  %342 = vmatpush.msra.mxu0 0.0
  %343 = vmatpush.msra.mxu0 0.0
  %344 = vmatpush.msra.mxu0 0.0
  %345 = vmatpush.msra.mxu0 0.0
  %346 = vmatpush.msra.mxu0 %v322
  %347 = vmatmul.f32.gmra.mxu0 %v329
  %v348 = vpop.f32.mrf.mxu0
  %v349 = vadd.f32 0.0, %v348
  %350 = vdwg.mxu0
  %351 = vmatpush.msra.mxu0 0.0
  %352 = vmatpush.msra.mxu0 0.0
  %353 = vmatpush.msra.mxu0 0.0
  %354 = vmatpush.msra.mxu0 0.0
  %355 = vmatpush.msra.mxu0 0.0
  %356 = vmatpush.msra.mxu0 0.0
  %357 = vmatpush.msra.mxu0 0.0
  %358 = vmatpush.msra.mxu0 0.0
  %359 = vmatpush.msra.mxu0 0.0
  %360 = vmatpush.msra.mxu0 0.0
  %361 = vmatpush.msra.mxu0 0.0
  %362 = vmatpush.msra.mxu0 0.0
  %363 = vmatpush.msra.mxu0 0.0
  %364 = vmatpush.msra.mxu0 0.0
  %365 = vmatpush.msra.mxu0 0.0
  %366 = vmatpush.msra.mxu0 %v323
  %367 = vmatmul.f32.gmra.mxu0 %v329
  %v368 = vpop.f32.mrf.mxu0
  %v369 = vadd.f32 0.0, %v368
  %370 = vdwg.mxu0
  %371 = vmatpush.msra.mxu0 0.0
  %372 = vmatpush.msra.mxu0 0.0
  %373 = vmatpush.msra.mxu0 0.0
  %374 = vmatpush.msra.mxu0 0.0
  %375 = vmatpush.msra.mxu0 0.0
  %376 = vmatpush.msra.mxu0 0.0
  %377 = vmatpush.msra.mxu0 0.0
  %378 = vmatpush.msra.mxu0 0.0
  %379 = vmatpush.msra.mxu0 0.0
  %380 = vmatpush.msra.mxu0 0.0
  %381 = vmatpush.msra.mxu0 0.0
  %382 = vmatpush.msra.mxu0 0.0
  %383 = vmatpush.msra.mxu0 0.0
  %384 = vmatpush.msra.mxu0 0.0
  %385 = vmatpush.msra.mxu0 0.0
  %386 = vmatpush.msra.mxu0 %v324
  %387 = vmatmul.f32.gmra.mxu0 %v329
  %v388 = vpop.f32.mrf.mxu0
  %v389 = vadd.f32 0.0, %v388
  %390 = vdwg.mxu0
  %391 = vmatpush.msra.mxu0 0.0
  %392 = vmatpush.msra.mxu0 0.0
  %393 = vmatpush.msra.mxu0 0.0
  %394 = vmatpush.msra.mxu0 0.0
  %395 = vmatpush.msra.mxu0 0.0
  %396 = vmatpush.msra.mxu0 0.0
  %397 = vmatpush.msra.mxu0 0.0
  %398 = vmatpush.msra.mxu0 0.0
  %399 = vmatpush.msra.mxu0 0.0
  %400 = vmatpush.msra.mxu0 0.0
  %401 = vmatpush.msra.mxu0 0.0
  %402 = vmatpush.msra.mxu0 0.0
  %403 = vmatpush.msra.mxu0 0.0
  %404 = vmatpush.msra.mxu0 0.0
  %405 = vmatpush.msra.mxu0 0.0
  %406 = vmatpush.msra.mxu0 %v325
  %407 = vmatmul.f32.gmra.mxu0 %v329
  %v408 = vpop.f32.mrf.mxu0
  %v409 = vadd.f32 0.0, %v408
  %410 = vdwg.mxu0
  %411 = vmatpush.msra.mxu0 %v93
  %412 = vmatpush.msra.mxu0 %v92
  %413 = vmatpush.msra.mxu0 %v91
  %414 = vmatpush.msra.mxu0 %v90
  %415 = vmatpush.msra.mxu0 %v89
  %416 = vmatpush.msra.mxu0 %v88
  %417 = vmatpush.msra.mxu0 %v87
  %418 = vmatpush.msra.mxu0 %v86
  %419 = vmatpush.msra.mxu0 %v85
  %420 = vmatpush.msra.mxu0 %v84
  %421 = vmatpush.msra.mxu0 %v83
  %422 = vmatpush.msra.mxu0 %v82
  %423 = vmatpush.msra.mxu0 %v81
  %424 = vmatpush.msra.mxu0 %v80
  %425 = vmatpush.msra.mxu0 %v79
  %426 = vmatpush.msra.mxu0 %v78
  %427 = vmatmul.f32.gmra.mxu0 %v349
  %v428 = vpop.f32.mrf.mxu0
  %v429 = vadd.f32 0.0, %v428
  %430 = vdwg.mxu0
  %431 = vmatpush.msra.mxu0 %v109
  %432 = vmatpush.msra.mxu0 %v108
  %433 = vmatpush.msra.mxu0 %v107
  %434 = vmatpush.msra.mxu0 %v106
  %435 = vmatpush.msra.mxu0 %v105
  %436 = vmatpush.msra.mxu0 %v104
  %437 = vmatpush.msra.mxu0 %v103
  %438 = vmatpush.msra.mxu0 %v102
  %439 = vmatpush.msra.mxu0 %v101
  %440 = vmatpush.msra.mxu0 %v100
  %441 = vmatpush.msra.mxu0 %v99
  %442 = vmatpush.msra.mxu0 %v98
  %443 = vmatpush.msra.mxu0 %v97
  %444 = vmatpush.msra.mxu0 %v96
  %445 = vmatpush.msra.mxu0 %v95
  %446 = vmatpush.msra.mxu0 %v94
  %447 = vmatmul.f32.gmra.mxu0 %v369
  %v448 = vpop.f32.mrf.mxu0
  %v449 = vadd.f32 %v429, %v448
  %450 = vdwg.mxu0
  %451 = vmatpush.msra.mxu0 %v125
  %452 = vmatpush.msra.mxu0 %v124
  %453 = vmatpush.msra.mxu0 %v123
  %454 = vmatpush.msra.mxu0 %v122
  %455 = vmatpush.msra.mxu0 %v121
  %456 = vmatpush.msra.mxu0 %v120
  %457 = vmatpush.msra.mxu0 %v119
  %458 = vmatpush.msra.mxu0 %v118
  %459 = vmatpush.msra.mxu0 %v117
  %460 = vmatpush.msra.mxu0 %v116
  %461 = vmatpush.msra.mxu0 %v115
  %462 = vmatpush.msra.mxu0 %v114
  %463 = vmatpush.msra.mxu0 %v113
  %464 = vmatpush.msra.mxu0 %v112
  %465 = vmatpush.msra.mxu0 %v111
  %466 = vmatpush.msra.mxu0 %v110
  %467 = vmatmul.f32.gmra.mxu0 %v389
  %v468 = vpop.f32.mrf.mxu0
  %v469 = vadd.f32 %v449, %v468
  %470 = vdwg.mxu0
  %471 = vmatpush.msra.mxu0 %v141
  %472 = vmatpush.msra.mxu0 %v140
  %473 = vmatpush.msra.mxu0 %v139
  %474 = vmatpush.msra.mxu0 %v138
  %475 = vmatpush.msra.mxu0 %v137
  %476 = vmatpush.msra.mxu0 %v136
  %477 = vmatpush.msra.mxu0 %v135
  %478 = vmatpush.msra.mxu0 %v134
  %479 = vmatpush.msra.mxu0 %v133
  %480 = vmatpush.msra.mxu0 %v132
  %481 = vmatpush.msra.mxu0 %v131
  %482 = vmatpush.msra.mxu0 %v130
  %483 = vmatpush.msra.mxu0 %v129
  %484 = vmatpush.msra.mxu0 %v128
  %485 = vmatpush.msra.mxu0 %v127
  %486 = vmatpush.msra.mxu0 %v126
  %487 = vmatmul.f32.gmra.mxu0 %v409
  %v488 = vpop.f32.mrf.mxu0
  %v489 = vadd.f32 %v469, %v488
  %490 = vdwg.mxu0
  %v491 = vmul.f32 %v489, 0.001953125
  %493 = vset.pattern.permute.xlu0 0
  %494 = vperm.xlu0 %493, %v491
  %v495 = vpop.permute.xlu0 %494
  %v497 = vsub.f32 %v349, %v495
  %v498 = vsub.f32 %v369, %v495
  %v499 = vsub.f32 %v389, %v495
  %v500 = vsub.f32 %v409, %v495
  %v501 = vmul.f32 %v497, %v497
  %v502 = vmul.f32 %v498, %v498
  %v503 = vmul.f32 %v499, %v499
  %v504 = vmul.f32 %v500, %v500
  %505 = vmatpush.msra.mxu0 %v93
  %506 = vmatpush.msra.mxu0 %v92
  %507 = vmatpush.msra.mxu0 %v91
  %508 = vmatpush.msra.mxu0 %v90
  %509 = vmatpush.msra.mxu0 %v89
  %510 = vmatpush.msra.mxu0 %v88
  %511 = vmatpush.msra.mxu0 %v87
  %512 = vmatpush.msra.mxu0 %v86
  %513 = vmatpush.msra.mxu0 %v85
  %514 = vmatpush.msra.mxu0 %v84
  %515 = vmatpush.msra.mxu0 %v83
  %516 = vmatpush.msra.mxu0 %v82
  %517 = vmatpush.msra.mxu0 %v81
  %518 = vmatpush.msra.mxu0 %v80
  %519 = vmatpush.msra.mxu0 %v79
  %520 = vmatpush.msra.mxu0 %v78
  %521 = vmatmul.f32.gmra.mxu0 %v501
  %v522 = vpop.f32.mrf.mxu0
  %v523 = vadd.f32 0.0, %v522
  %524 = vdwg.mxu0
  %525 = vmatpush.msra.mxu0 %v109
  %526 = vmatpush.msra.mxu0 %v108
  %527 = vmatpush.msra.mxu0 %v107
  %528 = vmatpush.msra.mxu0 %v106
  %529 = vmatpush.msra.mxu0 %v105
  %530 = vmatpush.msra.mxu0 %v104
  %531 = vmatpush.msra.mxu0 %v103
  %532 = vmatpush.msra.mxu0 %v102
  %533 = vmatpush.msra.mxu0 %v101
  %534 = vmatpush.msra.mxu0 %v100
  %535 = vmatpush.msra.mxu0 %v99
  %536 = vmatpush.msra.mxu0 %v98
  %537 = vmatpush.msra.mxu0 %v97
  %538 = vmatpush.msra.mxu0 %v96
  %539 = vmatpush.msra.mxu0 %v95
  %540 = vmatpush.msra.mxu0 %v94
  %541 = vmatmul.f32.gmra.mxu0 %v502
  %v542 = vpop.f32.mrf.mxu0
  %v543 = vadd.f32 %v523, %v542
  %544 = vdwg.mxu0
  %545 = vmatpush.msra.mxu0 %v125
  %546 = vmatpush.msra.mxu0 %v124
  %547 = vmatpush.msra.mxu0 %v123
  %548 = vmatpush.msra.mxu0 %v122
  %549 = vmatpush.msra.mxu0 %v121
  %550 = vmatpush.msra.mxu0 %v120
  %551 = vmatpush.msra.mxu0 %v119
  %552 = vmatpush.msra.mxu0 %v118
  %553 = vmatpush.msra.mxu0 %v117
  %554 = vmatpush.msra.mxu0 %v116
  %555 = vmatpush.msra.mxu0 %v115
  %556 = vmatpush.msra.mxu0 %v114
  %557 = vmatpush.msra.mxu0 %v113
  %558 = vmatpush.msra.mxu0 %v112
  %559 = vmatpush.msra.mxu0 %v111
  %560 = vmatpush.msra.mxu0 %v110
  %561 = vmatmul.f32.gmra.mxu0 %v503
  %v562 = vpop.f32.mrf.mxu0
  %v563 = vadd.f32 %v543, %v562
  %564 = vdwg.mxu0
  %565 = vmatpush.msra.mxu0 %v141
  %566 = vmatpush.msra.mxu0 %v140
  %567 = vmatpush.msra.mxu0 %v139
  %568 = vmatpush.msra.mxu0 %v138
  %569 = vmatpush.msra.mxu0 %v137
  %570 = vmatpush.msra.mxu0 %v136
  %571 = vmatpush.msra.mxu0 %v135
  %572 = vmatpush.msra.mxu0 %v134
  %573 = vmatpush.msra.mxu0 %v133
  %574 = vmatpush.msra.mxu0 %v132
  %575 = vmatpush.msra.mxu0 %v131
  %576 = vmatpush.msra.mxu0 %v130
  %577 = vmatpush.msra.mxu0 %v129
  %578 = vmatpush.msra.mxu0 %v128
  %579 = vmatpush.msra.mxu0 %v127
  %580 = vmatpush.msra.mxu0 %v126
  %581 = vmatmul.f32.gmra.mxu0 %v504
  %v582 = vpop.f32.mrf.mxu0
  %v583 = vadd.f32 %v563, %v582
  %584 = vdwg.mxu0
  %v585 = vmul.f32 %v583, 0.001953125
  %v586 = vadd.f32 %v585, 1e-05
  %v587 = vrsqrt.pop %v586
  %v588 = vmul.f32 %v587, %v586
  %v589 = vmul.f32 %v588, %v587
  %v590 = vmul.f32 0.5, %v589
  %v591 = vsub.f32 1.5, %v590
  %v592 = vmul.f32 %v587, %v591
  %vm593 = vweird.f32 %v586
  %vm594 = vweird.f32 %v587
  %vm595 = vmor %vm593, %vm594
  %v596 = vsel %vm595, %v587, %v592
  %598 = vset.pattern.permute.xlu0 0
  %599 = vperm.xlu0 %598, %v596
  %v600 = vpop.permute.xlu0 %599
  %v602 = vmul.f32 %v497, %v600
  %v603 = vmul.f32 %v498, %v600
  %v604 = vmul.f32 %v499, %v600
  %v605 = vmul.f32 %v500, %v600
  %v606 = vmax.f32 %v602, 0.0
  %v607 = vmax.f32 %v603, 0.0
  %v608 = vmax.f32 %v604, 0.0
  %v609 = vmax.f32 %v605, 0.0
  %v610 = vld [vmem:[%s3] sm:$0xff]
  %611 = vrot.lane.b32.xlu0 %v606, 1
  %v612 = vpop.permute.xlu0 %611
  %613 = vrot.lane.b32.xlu0 %v607, 1
  %v614 = vpop.permute.xlu0 %613
  %615 = vrot.lane.b32.xlu0 %v608, 1
  %v616 = vpop.permute.xlu0 %615
  %617 = vrot.lane.b32.xlu0 %v609, 1
  %v618 = vpop.permute.xlu0 %617
  %v619 = vsel %vm161, %v616, %v618
  %v620 = vsel %vm161, %v614, %v616
  %v621 = vsel %vm161, %v612, %v614
  %v622 = vsel %vm161, %v618, %v612
  %v623 = vmul.f32 %v622, %v38
  %v624 = vmul.f32 %v621, %v39
  %v625 = vmul.f32 %v620, %v40
  %v626 = vmul.f32 %v619, %v41
  %627 = vrot.lane.b32.xlu0 %v606, 127
  %v628 = vpop.permute.xlu0 %627
  %629 = vrot.lane.b32.xlu0 %v607, 127
  %v630 = vpop.permute.xlu0 %629
  %631 = vrot.lane.b32.xlu0 %v608, 127
  %v632 = vpop.permute.xlu0 %631
  %633 = vrot.lane.b32.xlu0 %v609, 127
  %v634 = vpop.permute.xlu0 %633
  %v635 = vsel %vm178, %v632, %v634
  %v636 = vsel %vm178, %v630, %v632
  %v637 = vsel %vm178, %v628, %v630
  %v638 = vsel %vm178, %v634, %v628
  %v639 = vmul.f32 %v637, %v50
  %v640 = vmul.f32 %v636, %v51
  %v641 = vmul.f32 %v635, %v52
  %v642 = vmul.f32 %v638, %v53
  %644 = vset.pattern.permute.xlu0 0
  %645 = vperm.xlu0 %644, %v610
  %v646 = vpop.permute.xlu0 %645
  %v648 = vmul.f32 %v623, %v646
  %v649 = vmul.f32 %v624, %v646
  %v650 = vmul.f32 %v625, %v646
  %v651 = vmul.f32 %v626, %v646
  %652 = vset.pattern.permute.xlu0 1
  %653 = vperm.xlu0 %652, %v610
  %v654 = vpop.permute.xlu0 %653
  %v656 = vmul.f32 %v606, %v654
  %v657 = vmul.f32 %v607, %v654
  %v658 = vmul.f32 %v608, %v654
  %v659 = vmul.f32 %v609, %v654
  %v660 = vadd.f32 %v648, %v656
  %v661 = vadd.f32 %v649, %v657
  %v662 = vadd.f32 %v650, %v658
  %v663 = vadd.f32 %v651, %v659
  %664 = vset.pattern.permute.xlu0 2
  %665 = vperm.xlu0 %664, %v610
  %v666 = vpop.permute.xlu0 %665
  %v668 = vmul.f32 %v639, %v666
  %v669 = vmul.f32 %v640, %v666
  %v670 = vmul.f32 %v641, %v666
  %v671 = vmul.f32 %v642, %v666
  %v672 = vadd.f32 %v660, %v668
  %v673 = vadd.f32 %v661, %v669
  %v674 = vadd.f32 %v662, %v670
  %v675 = vadd.f32 %v663, %v671
  %676 = vset.pattern.permute.xlu0 3
  %677 = vperm.xlu0 %676, %v610
  %v678 = vpop.permute.xlu0 %677
  %v680 = vmul.f32 %v623, %v678
  %v681 = vmul.f32 %v624, %v678
  %v682 = vmul.f32 %v625, %v678
  %v683 = vmul.f32 %v626, %v678
  %684 = vset.pattern.permute.xlu0 4
  %685 = vperm.xlu0 %684, %v610
  %v686 = vpop.permute.xlu0 %685
  %v688 = vmul.f32 %v606, %v686
  %v689 = vmul.f32 %v607, %v686
  %v690 = vmul.f32 %v608, %v686
  %v691 = vmul.f32 %v609, %v686
  %v692 = vadd.f32 %v680, %v688
  %v693 = vadd.f32 %v681, %v689
  %v694 = vadd.f32 %v682, %v690
  %v695 = vadd.f32 %v683, %v691
  %696 = vset.pattern.permute.xlu0 5
  %697 = vperm.xlu0 %696, %v610
  %v698 = vpop.permute.xlu0 %697
  %v700 = vmul.f32 %v639, %v698
  %v701 = vmul.f32 %v640, %v698
  %v702 = vmul.f32 %v641, %v698
  %v703 = vmul.f32 %v642, %v698
  %v704 = vadd.f32 %v692, %v700
  %v705 = vadd.f32 %v693, %v701
  %v706 = vadd.f32 %v694, %v702
  %v707 = vadd.f32 %v695, %v703
  %708 = vset.pattern.permute.xlu0 6
  %709 = vperm.xlu0 %708, %v610
  %v710 = vpop.permute.xlu0 %709
  %v712 = vmul.f32 %v623, %v710
  %v713 = vmul.f32 %v624, %v710
  %v714 = vmul.f32 %v625, %v710
  %v715 = vmul.f32 %v626, %v710
  %716 = vset.pattern.permute.xlu0 7
  %717 = vperm.xlu0 %716, %v610
  %v718 = vpop.permute.xlu0 %717
  %v720 = vmul.f32 %v606, %v718
  %v721 = vmul.f32 %v607, %v718
  %v722 = vmul.f32 %v608, %v718
  %v723 = vmul.f32 %v609, %v718
  %v724 = vadd.f32 %v712, %v720
  %v725 = vadd.f32 %v713, %v721
  %v726 = vadd.f32 %v714, %v722
  %v727 = vadd.f32 %v715, %v723
  %728 = vset.pattern.permute.xlu0 8
  %729 = vperm.xlu0 %728, %v610
  %v730 = vpop.permute.xlu0 %729
  %v732 = vmul.f32 %v639, %v730
  %v733 = vmul.f32 %v640, %v730
  %v734 = vmul.f32 %v641, %v730
  %v735 = vmul.f32 %v642, %v730
  %v736 = vadd.f32 %v724, %v732
  %v737 = vadd.f32 %v725, %v733
  %v738 = vadd.f32 %v726, %v734
  %v739 = vadd.f32 %v727, %v735
  %740 = vrot.lane.b32.xlu0 %v672, 16
  %v741 = vpop.permute.xlu0 %740
  %742 = vrot.lane.b32.xlu0 %v673, 16
  %v743 = vpop.permute.xlu0 %742
  %744 = vrot.lane.b32.xlu0 %v674, 16
  %v745 = vpop.permute.xlu0 %744
  %746 = vrot.lane.b32.xlu0 %v675, 16
  %v747 = vpop.permute.xlu0 %746
  %v748 = vsel %vm292, %v745, %v747
  %v749 = vsel %vm292, %v743, %v745
  %v750 = vsel %vm292, %v741, %v743
  %v751 = vsel %vm292, %v747, %v741
  %v752 = vmul.f32 %v751, %v62
  %v753 = vmul.f32 %v750, %v63
  %v754 = vmul.f32 %v749, %v64
  %v755 = vmul.f32 %v748, %v65
  %v756 = vadd.f32 %v704, %v752
  %v757 = vadd.f32 %v705, %v753
  %v758 = vadd.f32 %v706, %v754
  %v759 = vadd.f32 %v707, %v755
  %760 = vrot.lane.b32.xlu0 %v736, 112
  %v761 = vpop.permute.xlu0 %760
  %762 = vrot.lane.b32.xlu0 %v737, 112
  %v763 = vpop.permute.xlu0 %762
  %764 = vrot.lane.b32.xlu0 %v738, 112
  %v765 = vpop.permute.xlu0 %764
  %766 = vrot.lane.b32.xlu0 %v739, 112
  %v767 = vpop.permute.xlu0 %766
  %v768 = vsel %vm313, %v765, %v767
  %v769 = vsel %vm313, %v763, %v765
  %v770 = vsel %vm313, %v761, %v763
  %v771 = vsel %vm313, %v767, %v761
  %v772 = vmul.f32 %v770, %v74
  %v773 = vmul.f32 %v769, %v75
  %v774 = vmul.f32 %v768, %v76
  %v775 = vmul.f32 %v771, %v77
  %v776 = vadd.f32 %v756, %v772
  %v777 = vadd.f32 %v757, %v773
  %v778 = vadd.f32 %v758, %v774
  %v779 = vadd.f32 %v759, %v775
  %v780 = vld [vmem:[%s4] sm:$0xff]
  %v782 = vsel %vm327, %v780, 0
  %784 = vmatpush.msra.mxu0 0.0
  %785 = vmatpush.msra.mxu0 0.0
  %786 = vmatpush.msra.mxu0 0.0
  %787 = vmatpush.msra.mxu0 0.0
  %788 = vmatpush.msra.mxu0 0.0
  %789 = vmatpush.msra.mxu0 0.0
  %790 = vmatpush.msra.mxu0 0.0
  %791 = vmatpush.msra.mxu0 0.0
  %792 = vmatpush.msra.mxu0 0.0
  %793 = vmatpush.msra.mxu0 0.0
  %794 = vmatpush.msra.mxu0 0.0
  %795 = vmatpush.msra.mxu0 0.0
  %796 = vmatpush.msra.mxu0 0.0
  %797 = vmatpush.msra.mxu0 0.0
  %798 = vmatpush.msra.mxu0 0.0
  %799 = vmatpush.msra.mxu0 %v776
  %800 = vmatmul.f32.gmra.mxu0 %v782
  %v801 = vpop.f32.mrf.mxu0
  %v802 = vadd.f32 0.0, %v801
  %803 = vdwg.mxu0
  %804 = vmatpush.msra.mxu0 0.0
  %805 = vmatpush.msra.mxu0 0.0
  %806 = vmatpush.msra.mxu0 0.0
  %807 = vmatpush.msra.mxu0 0.0
  %808 = vmatpush.msra.mxu0 0.0
  %809 = vmatpush.msra.mxu0 0.0
  %810 = vmatpush.msra.mxu0 0.0
  %811 = vmatpush.msra.mxu0 0.0
  %812 = vmatpush.msra.mxu0 0.0
  %813 = vmatpush.msra.mxu0 0.0
  %814 = vmatpush.msra.mxu0 0.0
  %815 = vmatpush.msra.mxu0 0.0
  %816 = vmatpush.msra.mxu0 0.0
  %817 = vmatpush.msra.mxu0 0.0
  %818 = vmatpush.msra.mxu0 0.0
  %819 = vmatpush.msra.mxu0 %v777
  %820 = vmatmul.f32.gmra.mxu0 %v782
  %v821 = vpop.f32.mrf.mxu0
  %v822 = vadd.f32 0.0, %v821
  %823 = vdwg.mxu0
  %824 = vmatpush.msra.mxu0 0.0
  %825 = vmatpush.msra.mxu0 0.0
  %826 = vmatpush.msra.mxu0 0.0
  %827 = vmatpush.msra.mxu0 0.0
  %828 = vmatpush.msra.mxu0 0.0
  %829 = vmatpush.msra.mxu0 0.0
  %830 = vmatpush.msra.mxu0 0.0
  %831 = vmatpush.msra.mxu0 0.0
  %832 = vmatpush.msra.mxu0 0.0
  %833 = vmatpush.msra.mxu0 0.0
  %834 = vmatpush.msra.mxu0 0.0
  %835 = vmatpush.msra.mxu0 0.0
  %836 = vmatpush.msra.mxu0 0.0
  %837 = vmatpush.msra.mxu0 0.0
  %838 = vmatpush.msra.mxu0 0.0
  %839 = vmatpush.msra.mxu0 %v778
  %840 = vmatmul.f32.gmra.mxu0 %v782
  %v841 = vpop.f32.mrf.mxu0
  %v842 = vadd.f32 0.0, %v841
  %843 = vdwg.mxu0
  %844 = vmatpush.msra.mxu0 0.0
  %845 = vmatpush.msra.mxu0 0.0
  %846 = vmatpush.msra.mxu0 0.0
  %847 = vmatpush.msra.mxu0 0.0
  %848 = vmatpush.msra.mxu0 0.0
  %849 = vmatpush.msra.mxu0 0.0
  %850 = vmatpush.msra.mxu0 0.0
  %851 = vmatpush.msra.mxu0 0.0
  %852 = vmatpush.msra.mxu0 0.0
  %853 = vmatpush.msra.mxu0 0.0
  %854 = vmatpush.msra.mxu0 0.0
  %855 = vmatpush.msra.mxu0 0.0
  %856 = vmatpush.msra.mxu0 0.0
  %857 = vmatpush.msra.mxu0 0.0
  %858 = vmatpush.msra.mxu0 0.0
  %859 = vmatpush.msra.mxu0 %v779
  %860 = vmatmul.f32.gmra.mxu0 %v782
  %v861 = vpop.f32.mrf.mxu0
  %v862 = vadd.f32 0.0, %v861
  %863 = vdwg.mxu0
  %864 = vmatpush.msra.mxu0 %v93
  %865 = vmatpush.msra.mxu0 %v92
  %866 = vmatpush.msra.mxu0 %v91
  %867 = vmatpush.msra.mxu0 %v90
  %868 = vmatpush.msra.mxu0 %v89
  %869 = vmatpush.msra.mxu0 %v88
  %870 = vmatpush.msra.mxu0 %v87
  %871 = vmatpush.msra.mxu0 %v86
  %872 = vmatpush.msra.mxu0 %v85
  %873 = vmatpush.msra.mxu0 %v84
  %874 = vmatpush.msra.mxu0 %v83
  %875 = vmatpush.msra.mxu0 %v82
  %876 = vmatpush.msra.mxu0 %v81
  %877 = vmatpush.msra.mxu0 %v80
  %878 = vmatpush.msra.mxu0 %v79
  %879 = vmatpush.msra.mxu0 %v78
  %880 = vmatmul.f32.gmra.mxu0 %v802
  %v881 = vpop.f32.mrf.mxu0
  %v882 = vadd.f32 0.0, %v881
  %883 = vdwg.mxu0
  %884 = vmatpush.msra.mxu0 %v109
  %885 = vmatpush.msra.mxu0 %v108
  %886 = vmatpush.msra.mxu0 %v107
  %887 = vmatpush.msra.mxu0 %v106
  %888 = vmatpush.msra.mxu0 %v105
  %889 = vmatpush.msra.mxu0 %v104
  %890 = vmatpush.msra.mxu0 %v103
  %891 = vmatpush.msra.mxu0 %v102
  %892 = vmatpush.msra.mxu0 %v101
  %893 = vmatpush.msra.mxu0 %v100
  %894 = vmatpush.msra.mxu0 %v99
  %895 = vmatpush.msra.mxu0 %v98
  %896 = vmatpush.msra.mxu0 %v97
  %897 = vmatpush.msra.mxu0 %v96
  %898 = vmatpush.msra.mxu0 %v95
  %899 = vmatpush.msra.mxu0 %v94
  %900 = vmatmul.f32.gmra.mxu0 %v822
  %v901 = vpop.f32.mrf.mxu0
  %v902 = vadd.f32 %v882, %v901
  %903 = vdwg.mxu0
  %904 = vmatpush.msra.mxu0 %v125
  %905 = vmatpush.msra.mxu0 %v124
  %906 = vmatpush.msra.mxu0 %v123
  %907 = vmatpush.msra.mxu0 %v122
  %908 = vmatpush.msra.mxu0 %v121
  %909 = vmatpush.msra.mxu0 %v120
  %910 = vmatpush.msra.mxu0 %v119
  %911 = vmatpush.msra.mxu0 %v118
  %912 = vmatpush.msra.mxu0 %v117
  %913 = vmatpush.msra.mxu0 %v116
  %914 = vmatpush.msra.mxu0 %v115
  %915 = vmatpush.msra.mxu0 %v114
  %916 = vmatpush.msra.mxu0 %v113
  %917 = vmatpush.msra.mxu0 %v112
  %918 = vmatpush.msra.mxu0 %v111
  %919 = vmatpush.msra.mxu0 %v110
  %920 = vmatmul.f32.gmra.mxu0 %v842
  %v921 = vpop.f32.mrf.mxu0
  %v922 = vadd.f32 %v902, %v921
  %923 = vdwg.mxu0
  %924 = vmatpush.msra.mxu0 %v141
  %925 = vmatpush.msra.mxu0 %v140
  %926 = vmatpush.msra.mxu0 %v139
  %927 = vmatpush.msra.mxu0 %v138
  %928 = vmatpush.msra.mxu0 %v137
  %929 = vmatpush.msra.mxu0 %v136
  %930 = vmatpush.msra.mxu0 %v135
  %931 = vmatpush.msra.mxu0 %v134
  %932 = vmatpush.msra.mxu0 %v133
  %933 = vmatpush.msra.mxu0 %v132
  %934 = vmatpush.msra.mxu0 %v131
  %935 = vmatpush.msra.mxu0 %v130
  %936 = vmatpush.msra.mxu0 %v129
  %937 = vmatpush.msra.mxu0 %v128
  %938 = vmatpush.msra.mxu0 %v127
  %939 = vmatpush.msra.mxu0 %v126
  %940 = vmatmul.f32.gmra.mxu0 %v862
  %v941 = vpop.f32.mrf.mxu0
  %v942 = vadd.f32 %v922, %v941
  %943 = vdwg.mxu0
  %v944 = vmul.f32 %v942, 0.001953125
  %946 = vset.pattern.permute.xlu0 0
  %947 = vperm.xlu0 %946, %v944
  %v948 = vpop.permute.xlu0 %947
  %v950 = vsub.f32 %v802, %v948
  %v951 = vsub.f32 %v822, %v948
  %v952 = vsub.f32 %v842, %v948
  %v953 = vsub.f32 %v862, %v948
  %v954 = vmul.f32 %v950, %v950
  %v955 = vmul.f32 %v951, %v951
  %v956 = vmul.f32 %v952, %v952
  %v957 = vmul.f32 %v953, %v953
  %958 = vmatpush.msra.mxu0 %v93
  %959 = vmatpush.msra.mxu0 %v92
  %960 = vmatpush.msra.mxu0 %v91
  %961 = vmatpush.msra.mxu0 %v90
  %962 = vmatpush.msra.mxu0 %v89
  %963 = vmatpush.msra.mxu0 %v88
  %964 = vmatpush.msra.mxu0 %v87
  %965 = vmatpush.msra.mxu0 %v86
  %966 = vmatpush.msra.mxu0 %v85
  %967 = vmatpush.msra.mxu0 %v84
  %968 = vmatpush.msra.mxu0 %v83
  %969 = vmatpush.msra.mxu0 %v82
  %970 = vmatpush.msra.mxu0 %v81
  %971 = vmatpush.msra.mxu0 %v80
  %972 = vmatpush.msra.mxu0 %v79
  %973 = vmatpush.msra.mxu0 %v78
  %974 = vmatmul.f32.gmra.mxu0 %v954
  %v975 = vpop.f32.mrf.mxu0
  %v976 = vadd.f32 0.0, %v975
  %977 = vdwg.mxu0
  %978 = vmatpush.msra.mxu0 %v109
  %979 = vmatpush.msra.mxu0 %v108
  %980 = vmatpush.msra.mxu0 %v107
  %981 = vmatpush.msra.mxu0 %v106
  %982 = vmatpush.msra.mxu0 %v105
  %983 = vmatpush.msra.mxu0 %v104
  %984 = vmatpush.msra.mxu0 %v103
  %985 = vmatpush.msra.mxu0 %v102
  %986 = vmatpush.msra.mxu0 %v101
  %987 = vmatpush.msra.mxu0 %v100
  %988 = vmatpush.msra.mxu0 %v99
  %989 = vmatpush.msra.mxu0 %v98
  %990 = vmatpush.msra.mxu0 %v97
  %991 = vmatpush.msra.mxu0 %v96
  %992 = vmatpush.msra.mxu0 %v95
  %993 = vmatpush.msra.mxu0 %v94
  %994 = vmatmul.f32.gmra.mxu0 %v955
  %v995 = vpop.f32.mrf.mxu0
  %v996 = vadd.f32 %v976, %v995
  %997 = vdwg.mxu0
  %998 = vmatpush.msra.mxu0 %v125
  %999 = vmatpush.msra.mxu0 %v124
  %1000 = vmatpush.msra.mxu0 %v123
  %1001 = vmatpush.msra.mxu0 %v122
  %1002 = vmatpush.msra.mxu0 %v121
  %1003 = vmatpush.msra.mxu0 %v120
  %1004 = vmatpush.msra.mxu0 %v119
  %1005 = vmatpush.msra.mxu0 %v118
  %1006 = vmatpush.msra.mxu0 %v117
  %1007 = vmatpush.msra.mxu0 %v116
  %1008 = vmatpush.msra.mxu0 %v115
  %1009 = vmatpush.msra.mxu0 %v114
  %1010 = vmatpush.msra.mxu0 %v113
  %1011 = vmatpush.msra.mxu0 %v112
  %1012 = vmatpush.msra.mxu0 %v111
  %1013 = vmatpush.msra.mxu0 %v110
  %1014 = vmatmul.f32.gmra.mxu0 %v956
  %v1015 = vpop.f32.mrf.mxu0
  %v1016 = vadd.f32 %v996, %v1015
  %1017 = vdwg.mxu0
  %1018 = vmatpush.msra.mxu0 %v141
  %1019 = vmatpush.msra.mxu0 %v140
  %1020 = vmatpush.msra.mxu0 %v139
  %1021 = vmatpush.msra.mxu0 %v138
  %1022 = vmatpush.msra.mxu0 %v137
  %1023 = vmatpush.msra.mxu0 %v136
  %1024 = vmatpush.msra.mxu0 %v135
  %1025 = vmatpush.msra.mxu0 %v134
  %1026 = vmatpush.msra.mxu0 %v133
  %1027 = vmatpush.msra.mxu0 %v132
  %1028 = vmatpush.msra.mxu0 %v131
  %1029 = vmatpush.msra.mxu0 %v130
  %1030 = vmatpush.msra.mxu0 %v129
  %1031 = vmatpush.msra.mxu0 %v128
  %1032 = vmatpush.msra.mxu0 %v127
  %1033 = vmatpush.msra.mxu0 %v126
  %1034 = vmatmul.f32.gmra.mxu0 %v957
  %v1035 = vpop.f32.mrf.mxu0
  %v1036 = vadd.f32 %v1016, %v1035
  %1037 = vdwg.mxu0
  %v1038 = vmul.f32 %v1036, 0.001953125
  %v1039 = vadd.f32 %v1038, 1e-05
  %v1040 = vrsqrt.pop %v1039
  %v1041 = vmul.f32 %v1040, %v1039
  %v1042 = vmul.f32 %v1041, %v1040
  %v1043 = vmul.f32 0.5, %v1042
  %v1044 = vsub.f32 1.5, %v1043
  %v1045 = vmul.f32 %v1040, %v1044
  %vm1046 = vweird.f32 %v1039
  %vm1047 = vweird.f32 %v1040
  %vm1048 = vmor %vm1046, %vm1047
  %v1049 = vsel %vm1048, %v1040, %v1045
  %1051 = vset.pattern.permute.xlu0 0
  %1052 = vperm.xlu0 %1051, %v1049
  %v1053 = vpop.permute.xlu0 %1052
  %v1055 = vmul.f32 %v950, %v1053
  %v1056 = vmul.f32 %v951, %v1053
  %v1057 = vmul.f32 %v952, %v1053
  %v1058 = vmul.f32 %v953, %v1053
  %1059 = vst [vmem:[%s7] sm:$0xff] %v1055
  %1060 = vst [vmem:[%s7 + $0x8] sm:$0xff] %v1056
  %1061 = vst [vmem:[%s7 + $0x10] sm:$0xff] %v1057
  %1062 = vst [vmem:[%s7 + $0x18] sm:$0xff] %v1058
  // Predicated region
  $region30: #{train_cell_sep_conv_3x3.1} parent=0 // pred_check
    _
  $region31: #{train_cell_sep_conv_3x3.1} parent=0 // pred_check_branch
    %1064 = sbr.rel (0) target = $region33
  $region32: #{train_cell_sep_conv_3x3.1} parent=0 // pred_region
    _
  $region33: #{train_cell_sep_conv_3x3.1} parent=0 // pred_fallthru
    _
  // Predicated region
  $region34: #{train_cell_sep_conv_3x3.1} parent=0 // pred_check
    _
  $region35: #{train_cell_sep_conv_3x3.1} parent=0 // pred_check_branch
    %1066 = sbr.rel (0) target = $region37
  $region36: #{train_cell_sep_conv_3x3.1} parent=0 // pred_region
    _
  $region37: #{train_cell_sep_conv_3x3.1} parent=0 // pred_fallthru
    _

</llo_original>
